<compile_context>
chip_gen: v7x
topology: tpu7x:2x2x1
jax: 0.10.0
libtpu: 0.0.40
codegen_flags: <defaults>
</compile_context>

<pallas_src>
import math

import jax
import jax.numpy as jnp
from jax.experimental import pallas as pl
from jax.experimental.pallas import tpu as pltpu


def _round_up(x, m):
    return ((x + m - 1) // m) * m


def _lcm(a, b):
    return a * b // math.gcd(a, b)


def _build_qnet_call(B_pad, TB, S, H, A, pack_x, pack_out):
    """Builds the pallas_call for one (B_pad, TB, packing) configuration."""
    grid = (B_pad // TB,)

    if pack_x:
        x_spec = pl.BlockSpec((TB * S // 128, 128), lambda i: (i, 0))
    else:
        x_spec = pl.BlockSpec((TB, S), lambda i: (i, 0))

    if pack_out:
        out_shape = jax.ShapeDtypeStruct((B_pad * A // 128, 128), jnp.float32)
        out_spec = pl.BlockSpec((TB * A // 128, 128), lambda i: (i, 0))
    else:
        out_shape = jax.ShapeDtypeStruct((B_pad, A), jnp.float32)
        out_spec = pl.BlockSpec((TB, A), lambda i: (i, 0))

    def kernel(x_ref, w1_ref, b1_ref, w2_ref, b2_ref, out_ref):
        # Unpack the lane-dense input slab back to [TB, S] (no-op when not
        # packed).  The relayout runs on VPU/XLU slack and is hidden under the
        # pipeline; the kernel is DMA/overhead bound, not compute bound.
        x = x_ref[...].reshape(TB, S)

        # fc1 + ReLU
        h = jnp.dot(x, w1_ref[...], preferred_element_type=jnp.float32)
        h = jnp.maximum(h + b1_ref[...], 0.0)                  # bias broadcast [1, H]

        # fc2
        logits = jnp.dot(h, w2_ref[...], preferred_element_type=jnp.float32)
        logits = logits + b2_ref[...]                          # bias broadcast [1, A]

        # numerically-stable softmax over the last dim (actions)
        m = jnp.max(logits, axis=-1, keepdims=True)
        e = jnp.exp(logits - m)
        denom = jnp.sum(e, axis=-1, keepdims=True)
        # EUP approximate reciprocal + one Newton-Raphson step.
        inv = pl.reciprocal(denom, approx=True)
        inv = inv * (2.0 - denom * inv)
        probs = (e * inv).astype(out_ref.dtype)

        # Repack to the lane-dense output slab (no-op when not packed) so the
        # store is an unmasked full-lane vst and the writeback DMA is a
        # contiguous full-tile copy.
        out_ref[...] = probs.reshape(out_ref.shape)

    return pl.pallas_call(
        kernel,
        out_shape=out_shape,
        grid_spec=pltpu.PrefetchScalarGridSpec(
            num_scalar_prefetch=0,
            grid=grid,
            in_specs=[
                # x streams through VMEM, one block per grid step.
                x_spec,
                # Weights/biases: constant block index -> VMEM-resident.
                pl.BlockSpec((S, H), lambda i: (0, 0)),
                pl.BlockSpec((1, H), lambda i: (0, 0)),
                pl.BlockSpec((H, A), lambda i: (0, 0)),
                pl.BlockSpec((1, A), lambda i: (0, 0)),
            ],
            out_specs=out_spec,
        ),
        compiler_params=pltpu.CompilerParams(
            dimension_semantics=("parallel",),
        ),
    )


def qnet_forward(x, w1, b1, w2, b2, *, tb_max=1024):
    """x: [B, S] f32; w1: [S, H]; b1: [1, H]; w2: [H, A]; b2: [1, A] -> [B, A]."""
    B, S = x.shape
    H = w1.shape[1]
    A = w2.shape[1]
    x = x.astype(jnp.float32)

    # Lane-dense packing is exact only when S / A divide 128 evenly.
    can_pack_x = (S < 128) and (128 % S == 0)
    can_pack_out = (A < 128) and (128 % A == 0)

    def attempt(pack_x, pack_out):
        # Batch-tile alignment:
        #  - 8 sublanes always;
        #  - 1024//S (resp. 1024//A) so packed blocks (TB*S//128, 128) keep a
        #    sublane dim that is a multiple of 8 -> every block is (8,128)-legal.
        align = 8
        if pack_x:
            align = _lcm(align, 1024 // S)
        if pack_out:
            align = _lcm(align, 1024 // A)

        TB = min(max(int(tb_max), align), _round_up(B, align))
        TB = max(align, (TB // align) * align)
        B_pad = _round_up(B, TB)

        # v7x has two TensorCores: if the whole batch fits in one grid step
        # and splitting is meaningful, halve the tile so both cores get work.
        if B_pad // TB == 1 and TB >= 2 * align and B > align:
            TB = max(align, ((TB // 2) // align) * align)
            B_pad = _round_up(B, TB)

        xp = x if B_pad == B else jnp.pad(x, ((0, B_pad - B), (0, 0)))
        # Free wrapper reshape: HBM layout is contiguous row-major.
        x_in = xp.reshape(B_pad * S // 128, 128) if pack_x else xp

        call = _build_qnet_call(B_pad, TB, S, H, A, pack_x, pack_out)
        out = call(x_in, w1, b1, w2, b2)

        if pack_out:
            out = out.reshape(B_pad, A)   # free wrapper reshape
        return out[:B] if B_pad != B else out

    try:
        return attempt(can_pack_x, can_pack_out)
    except Exception:
        # Fallback for Mosaic versions that cannot lower the in-kernel lane
        # relayout (reshape across the lane dim): padded-lane layout.
        return attempt(False, False)


def init_params(key, state_size, hidden_dim, action_size):
    # Deterministic init mimicking nn.Linear's uniform(-1/sqrt(fan_in), 1/sqrt(fan_in)).
    k1, k2, k3, k4 = jax.random.split(key, 4)
    lim1 = 1.0 / jnp.sqrt(jnp.float32(state_size))
    lim2 = 1.0 / jnp.sqrt(jnp.float32(hidden_dim))
    w1 = jax.random.uniform(k1, (state_size, hidden_dim), jnp.float32, -lim1, lim1)
    b1 = jax.random.uniform(k2, (1, hidden_dim), jnp.float32, -lim1, lim1)
    w2 = jax.random.uniform(k3, (hidden_dim, action_size), jnp.float32, -lim2, lim2)
    b2 = jax.random.uniform(k4, (1, action_size), jnp.float32, -lim2, lim2)
    return w1, b1, w2, b2


def qnet_reference(x, w1, b1, w2, b2):
    h = jnp.maximum(x @ w1 + b1, 0.0)
    return jax.nn.softmax(h @ w2 + b2, axis=-1)


if __name__ == "__main__":
    state_size, hidden_dim, action_size = 4, 32, 2
    batch = 8

    key = jax.random.PRNGKey(0)
    kx, kp, kx2 = jax.random.split(key, 3)
    x = jax.random.normal(kx, (batch, state_size), jnp.float32)
    w1, b1, w2, b2 = init_params(kp, state_size, hidden_dim, action_size)

    # Primary small-batch check (single grid step, packed layout).
    out = jax.block_until_ready(qnet_forward(x, w1, b1, w2, b2))
    ref = qnet_reference(x, w1, b1, w2, b2)
    assert out.shape == (batch, action_size)
    assert jnp.allclose(out, ref, atol=1e-4, rtol=1e-4), "mismatch vs reference (small batch)"
    assert jnp.allclose(jnp.sum(out, axis=-1), 1.0, atol=1e-4)

    # Secondary check: batch not a multiple of the tile -> exercises the
    # multi-step pipelined grid, padding, packing and the final slice.
    batch2 = 1500
    x2 = jax.random.normal(kx2, (batch2, state_size), jnp.float32)
    out2 = jax.block_until_ready(qnet_forward(x2, w1, b1, w2, b2))
    ref2 = qnet_reference(x2, w1, b1, w2, b2)
    assert out2.shape == (batch2, action_size)
    assert jnp.allclose(out2, ref2, atol=1e-4, rtol=1e-4), "mismatch vs reference (tiled batch)"
    assert jnp.allclose(jnp.sum(out2, axis=-1), 1.0, atol=1e-4)

    print("KERNEL_OK")
</pallas_src>

<mosaic_0001>
module attributes {stable_mosaic.version = 11 : i64} {
  func.func @kernel(%arg0: i32, %arg1: memref<16x128xf32, #tpu.memory_space<vmem>>, %arg2: memref<4x32xf32, #tpu.memory_space<vmem>>, %arg3: memref<1x32xf32, #tpu.memory_space<vmem>>, %arg4: memref<32x2xf32, #tpu.memory_space<vmem>>, %arg5: memref<1x2xf32, #tpu.memory_space<vmem>>, %arg6: memref<8x128xf32, #tpu.memory_space<vmem>>) attributes {dimension_semantics = [#tpu.dimension_semantics<parallel>], iteration_bounds = array<i64: 1>, scalar_prefetch = 0 : i64, scratch_operands = 0 : i64, tpu.core_type = #tpu.core_type<tc>, window_params = [{transform_indices = @transform_0, window_bounds = array<i64: 16, 128>}, {pipeline_mode = #tpu.pipeline_mode<synchronous>, transform_indices = @transform_1, window_bounds = array<i64: 4, 32>}, {pipeline_mode = #tpu.pipeline_mode<synchronous>, transform_indices = @transform_2, window_bounds = array<i64: 1, 32>}, {pipeline_mode = #tpu.pipeline_mode<synchronous>, transform_indices = @transform_3, window_bounds = array<i64: 32, 2>}, {pipeline_mode = #tpu.pipeline_mode<synchronous>, transform_indices = @transform_4, window_bounds = array<i64: 1, 2>}, {transform_indices = @transform_5, window_bounds = array<i64: 8, 128>}]} {
    %c0 = arith.constant 0 : index
    %c0_0 = arith.constant 0 : index
    %0 = vector.load %arg1[%c0, %c0_0] : memref<16x128xf32, #tpu.memory_space<vmem>>, vector<16x128xf32>
    %1 = vector.shape_cast %0 : vector<16x128xf32> to vector<512x4xf32>
    %c0_1 = arith.constant 0 : index
    %c0_2 = arith.constant 0 : index
    %2 = vector.load %arg2[%c0_1, %c0_2] : memref<4x32xf32, #tpu.memory_space<vmem>>, vector<4x32xf32>
    %cst = arith.constant dense<0.000000e+00> : vector<512x32xf32>
    %3 = tpu.matmul %1, %2, %cst {dimension_numbers = #tpu.dot_dimension_numbers<[1], [0], [0], [1], [0, 0, 1, 1], [], []>} : vector<512x4xf32>, vector<4x32xf32>, vector<512x32xf32> -> vector<512x32xf32>
    %c0_3 = arith.constant 0 : index
    %c0_4 = arith.constant 0 : index
    %4 = vector.load %arg3[%c0_3, %c0_4] : memref<1x32xf32, #tpu.memory_space<vmem>>, vector<1x32xf32>
    %5 = vector.broadcast %4 : vector<1x32xf32> to vector<512x32xf32>
    %6 = arith.addf %3, %5 : vector<512x32xf32>
    %cst_5 = arith.constant 0.000000e+00 : f32
    %7 = vector.broadcast %cst_5 : f32 to vector<512x32xf32>
    %8 = arith.maximumf %6, %7 : vector<512x32xf32>
    %c0_6 = arith.constant 0 : index
    %c0_7 = arith.constant 0 : index
    %9 = vector.load %arg4[%c0_6, %c0_7] : memref<32x2xf32, #tpu.memory_space<vmem>>, vector<32x2xf32>
    %cst_8 = arith.constant dense<0.000000e+00> : vector<512x2xf32>
    %10 = tpu.matmul %8, %9, %cst_8 {dimension_numbers = #tpu.dot_dimension_numbers<[1], [0], [0], [1], [0, 0, 1, 1], [], []>} : vector<512x32xf32>, vector<32x2xf32>, vector<512x2xf32> -> vector<512x2xf32>
    %c0_9 = arith.constant 0 : index
    %c0_10 = arith.constant 0 : index
    %11 = vector.load %arg5[%c0_9, %c0_10] : memref<1x2xf32, #tpu.memory_space<vmem>>, vector<1x2xf32>
    %12 = vector.broadcast %11 : vector<1x2xf32> to vector<512x2xf32>
    %13 = arith.addf %10, %12 : vector<512x2xf32>
    %cst_11 = arith.constant dense<0xFF800000> : vector<512xf32>
    %14 = vector.multi_reduction <maximumf>, %13, %cst_11 [1] : vector<512x2xf32> to vector<512xf32>
    %15 = vector.shape_cast %14 : vector<512xf32> to vector<512x1xf32>
    %16 = vector.broadcast %15 : vector<512x1xf32> to vector<512x2xf32>
    %17 = arith.subf %13, %16 : vector<512x2xf32>
    %18 = math.exp %17 : vector<512x2xf32>
    %cst_12 = arith.constant dense<0.000000e+00> : vector<512xf32>
    %19 = vector.multi_reduction <add>, %18, %cst_12 [1] : vector<512x2xf32> to vector<512xf32>
    %20 = vector.shape_cast %19 : vector<512xf32> to vector<512x1xf32>
    %21 = tpu.reciprocal %20 {approx = true} : vector<512x1xf32> -> vector<512x1xf32>
    %22 = arith.mulf %20, %21 : vector<512x1xf32>
    %cst_13 = arith.constant 2.000000e+00 : f32
    %23 = vector.broadcast %cst_13 : f32 to vector<512x1xf32>
    %24 = arith.subf %23, %22 : vector<512x1xf32>
    %25 = arith.mulf %21, %24 : vector<512x1xf32>
    %26 = vector.broadcast %25 : vector<512x1xf32> to vector<512x2xf32>
    %27 = arith.mulf %18, %26 : vector<512x2xf32>
    %28 = vector.shape_cast %27 : vector<512x2xf32> to vector<8x128xf32>
    %c0_14 = arith.constant 0 : index
    %c0_15 = arith.constant 0 : index
    %29 = vector.load %arg6[%c0_14, %c0_15] : memref<8x128xf32, #tpu.memory_space<vmem>>, vector<8x128xf32>
    tpu.vector_store %arg6[%c0_14, %c0_15], %28 {strides = array<i32>} : memref<8x128xf32, #tpu.memory_space<vmem>>, vector<8x128xf32>,
    return
  }
  func.func @transform_0(%arg0: i32) -> (i32, i32) {
    %c0_i32 = arith.constant 0 : i32
    %c0_i32_0 = arith.constant 0 : i32
    return %arg0, %c0_i32 : i32, i32
  }
  func.func @transform_1(%arg0: i32) -> (i32, i32) {
    %c0_i32 = arith.constant 0 : i32
    %c0_i32_0 = arith.constant 0 : i32
    %c0_i32_1 = arith.constant 0 : i32
    return %c0_i32, %c0_i32_0 : i32, i32
  }
  func.func @transform_2(%arg0: i32) -> (i32, i32) {
    %c0_i32 = arith.constant 0 : i32
    %c0_i32_0 = arith.constant 0 : i32
    %c0_i32_1 = arith.constant 0 : i32
    return %c0_i32, %c0_i32_0 : i32, i32
  }
  func.func @transform_3(%arg0: i32) -> (i32, i32) {
    %c0_i32 = arith.constant 0 : i32
    %c0_i32_0 = arith.constant 0 : i32
    %c0_i32_1 = arith.constant 0 : i32
    return %c0_i32, %c0_i32_0 : i32, i32
  }
  func.func @transform_4(%arg0: i32) -> (i32, i32) {
    %c0_i32 = arith.constant 0 : i32
    %c0_i32_0 = arith.constant 0 : i32
    %c0_i32_1 = arith.constant 0 : i32
    return %c0_i32, %c0_i32_0 : i32, i32
  }
  func.func @transform_5(%arg0: i32) -> (i32, i32) {
    %c0_i32 = arith.constant 0 : i32
    %c0_i32_0 = arith.constant 0 : i32
    return %arg0, %c0_i32 : i32, i32
  }
}

module attributes {stable_mosaic.version = 11 : i64} {
  func.func @kernel(%arg0: i32, %arg1: memref<8x4xf32, #tpu.memory_space<vmem>>, %arg2: memref<4x32xf32, #tpu.memory_space<vmem>>, %arg3: memref<1x32xf32, #tpu.memory_space<vmem>>, %arg4: memref<32x2xf32, #tpu.memory_space<vmem>>, %arg5: memref<1x2xf32, #tpu.memory_space<vmem>>, %arg6: memref<8x2xf32, #tpu.memory_space<vmem>>) attributes {dimension_semantics = [#tpu.dimension_semantics<parallel>], iteration_bounds = array<i64: 1>, scalar_prefetch = 0 : i64, scratch_operands = 0 : i64, tpu.core_type = #tpu.core_type<tc>, window_params = [{transform_indices = @transform_0, window_bounds = array<i64: 8, 4>}, {pipeline_mode = #tpu.pipeline_mode<synchronous>, transform_indices = @transform_1, window_bounds = array<i64: 4, 32>}, {pipeline_mode = #tpu.pipeline_mode<synchronous>, transform_indices = @transform_2, window_bounds = array<i64: 1, 32>}, {pipeline_mode = #tpu.pipeline_mode<synchronous>, transform_indices = @transform_3, window_bounds = array<i64: 32, 2>}, {pipeline_mode = #tpu.pipeline_mode<synchronous>, transform_indices = @transform_4, window_bounds = array<i64: 1, 2>}, {transform_indices = @transform_5, window_bounds = array<i64: 8, 2>}]} {
    %c0 = arith.constant 0 : index
    %c0_0 = arith.constant 0 : index
    %0 = vector.load %arg1[%c0, %c0_0] : memref<8x4xf32, #tpu.memory_space<vmem>>, vector<8x4xf32>
    %c0_1 = arith.constant 0 : index
    %c0_2 = arith.constant 0 : index
    %1 = vector.load %arg2[%c0_1, %c0_2] : memref<4x32xf32, #tpu.memory_space<vmem>>, vector<4x32xf32>
    %cst = arith.constant dense<0.000000e+00> : vector<8x32xf32>
    %2 = tpu.matmul %0, %1, %cst {dimension_numbers = #tpu.dot_dimension_numbers<[1], [0], [0], [1], [0, 0, 1, 1], [], []>} : vector<8x4xf32>, vector<4x32xf32>, vector<8x32xf32> -> vector<8x32xf32>
    %c0_3 = arith.constant 0 : index
    %c0_4 = arith.constant 0 : index
    %3 = vector.load %arg3[%c0_3, %c0_4] : memref<1x32xf32, #tpu.memory_space<vmem>>, vector<1x32xf32>
    %4 = vector.broadcast %3 : vector<1x32xf32> to vector<8x32xf32>
    %5 = arith.addf %2, %4 : vector<8x32xf32>
    %cst_5 = arith.constant 0.000000e+00 : f32
    %6 = vector.broadcast %cst_5 : f32 to vector<8x32xf32>
    %7 = arith.maximumf %5, %6 : vector<8x32xf32>
    %c0_6 = arith.constant 0 : index
    %c0_7 = arith.constant 0 : index
    %8 = vector.load %arg4[%c0_6, %c0_7] : memref<32x2xf32, #tpu.memory_space<vmem>>, vector<32x2xf32>
    %cst_8 = arith.constant dense<0.000000e+00> : vector<8x2xf32>
    %9 = tpu.matmul %7, %8, %cst_8 {dimension_numbers = #tpu.dot_dimension_numbers<[1], [0], [0], [1], [0, 0, 1, 1], [], []>} : vector<8x32xf32>, vector<32x2xf32>, vector<8x2xf32> -> vector<8x2xf32>
    %c0_9 = arith.constant 0 : index
    %c0_10 = arith.constant 0 : index
    %10 = vector.load %arg5[%c0_9, %c0_10] : memref<1x2xf32, #tpu.memory_space<vmem>>, vector<1x2xf32>
    %11 = vector.broadcast %10 : vector<1x2xf32> to vector<8x2xf32>
    %12 = arith.addf %9, %11 : vector<8x2xf32>
    %cst_11 = arith.constant dense<0xFF800000> : vector<8xf32>
    %13 = vector.multi_reduction <maximumf>, %12, %cst_11 [1] : vector<8x2xf32> to vector<8xf32>
    %14 = vector.shape_cast %13 : vector<8xf32> to vector<8x1xf32>
    %15 = vector.broadcast %14 : vector<8x1xf32> to vector<8x2xf32>
    %16 = arith.subf %12, %15 : vector<8x2xf32>
    %17 = math.exp %16 : vector<8x2xf32>
    %cst_12 = arith.constant dense<0.000000e+00> : vector<8xf32>
    %18 = vector.multi_reduction <add>, %17, %cst_12 [1] : vector<8x2xf32> to vector<8xf32>
    %19 = vector.shape_cast %18 : vector<8xf32> to vector<8x1xf32>
    %20 = tpu.reciprocal %19 {approx = true} : vector<8x1xf32> -> vector<8x1xf32>
    %21 = arith.mulf %19, %20 : vector<8x1xf32>
    %cst_13 = arith.constant 2.000000e+00 : f32
    %22 = vector.broadcast %cst_13 : f32 to vector<8x1xf32>
    %23 = arith.subf %22, %21 : vector<8x1xf32>
    %24 = arith.mulf %20, %23 : vector<8x1xf32>
    %25 = vector.broadcast %24 : vector<8x1xf32> to vector<8x2xf32>
    %26 = arith.mulf %17, %25 : vector<8x2xf32>
    %c0_14 = arith.constant 0 : index
    %c0_15 = arith.constant 0 : index
    %27 = vector.load %arg6[%c0_14, %c0_15] : memref<8x2xf32, #tpu.memory_space<vmem>>, vector<8x2xf32>
    tpu.vector_store %arg6[%c0_14, %c0_15], %26 {strides = array<i32>} : memref<8x2xf32, #tpu.memory_space<vmem>>, vector<8x2xf32>,
    return
  }
  func.func @transform_0(%arg0: i32) -> (i32, i32) {
    %c0_i32 = arith.constant 0 : i32
    %c0_i32_0 = arith.constant 0 : i32
    return %arg0, %c0_i32 : i32, i32
  }
  func.func @transform_1(%arg0: i32) -> (i32, i32) {
    %c0_i32 = arith.constant 0 : i32
    %c0_i32_0 = arith.constant 0 : i32
    %c0_i32_1 = arith.constant 0 : i32
    return %c0_i32, %c0_i32_0 : i32, i32
  }
  func.func @transform_2(%arg0: i32) -> (i32, i32) {
    %c0_i32 = arith.constant 0 : i32
    %c0_i32_0 = arith.constant 0 : i32
    %c0_i32_1 = arith.constant 0 : i32
    return %c0_i32, %c0_i32_0 : i32, i32
  }
  func.func @transform_3(%arg0: i32) -> (i32, i32) {
    %c0_i32 = arith.constant 0 : i32
    %c0_i32_0 = arith.constant 0 : i32
    %c0_i32_1 = arith.constant 0 : i32
    return %c0_i32, %c0_i32_0 : i32, i32
  }
  func.func @transform_4(%arg0: i32) -> (i32, i32) {
    %c0_i32 = arith.constant 0 : i32
    %c0_i32_0 = arith.constant 0 : i32
    %c0_i32_1 = arith.constant 0 : i32
    return %c0_i32, %c0_i32_0 : i32, i32
  }
  func.func @transform_5(%arg0: i32) -> (i32, i32) {
    %c0_i32 = arith.constant 0 : i32
    %c0_i32_0 = arith.constant 0 : i32
    return %arg0, %c0_i32 : i32, i32
  }
}

</mosaic_0001>

<llo_original>
// kernel: tpu_custom_call.1
$region0: #{tpu_custom_call.1}
  #allocation0 [shape = 'u32[]', space=smem, size = 0x4, offset = 0x4, fixed_abs, tag = 'smem constant byte address 0x4 - core index']
  #allocation1 [shape = 'u32[144,128]{1,0:T(1,128)}', space=vmem, size = 0x12000, scoped, tag = 'internal scratch']
  %s0 = inlined_call_operand.vmem [shape: f32[8,4], index: 0, kind: input, shape index: {}]
  %s1 = inlined_call_operand.vmem [shape: f32[4,32], index: 1, kind: input, shape index: {}]
  %s2 = inlined_call_operand.vmem [shape: f32[1,32], index: 2, kind: input, shape index: {}]
  %s3 = inlined_call_operand.vmem [shape: f32[32,2], index: 3, kind: input, shape index: {}]
  %s4 = inlined_call_operand.vmem [shape: f32[1,2], index: 4, kind: input, shape index: {}]
  %s5 = inlined_call_operand.vmem [shape: f32[8,2], index: 5, kind: output, shape index: {}]
  %s6 = sld [smem:[#allocation0]]
  $region30: #{tpu_custom_call.1} parent=0
    _
  %s8 = ssub.s32 1, %s6
  %s9 = scalar_select 0, %s8, %s6
  // Predicated region
  $region2: #{tpu_custom_call.1} parent=0 // pred_check
    _
  $region3: #{tpu_custom_call.1} parent=0 // pred_check_branch
    %11 = sbr.rel (0) target = $region5
  $region4: #{tpu_custom_call.1} parent=0 // pred_region
    _
  $region5: #{tpu_custom_call.1} parent=0 // pred_fallthru
    _
  // Predicated region
  $region6: #{tpu_custom_call.1} parent=0 // pred_check
    _
  $region7: #{tpu_custom_call.1} parent=0 // pred_check_branch
    %13 = sbr.rel (0) target = $region9
  $region8: #{tpu_custom_call.1} parent=0 // pred_region
    _
  $region9: #{tpu_custom_call.1} parent=0 // pred_fallthru
    _
  // Predicated region
  $region10: #{tpu_custom_call.1} parent=0 // pred_check
    _
  $region11: #{tpu_custom_call.1} parent=0 // pred_check_branch
    %15 = sbr.rel (0) target = $region13
  $region12: #{tpu_custom_call.1} parent=0 // pred_region
    _
  $region13: #{tpu_custom_call.1} parent=0 // pred_fallthru
    _
  // Predicated region
  $region14: #{tpu_custom_call.1} parent=0 // pred_check
    _
  $region15: #{tpu_custom_call.1} parent=0 // pred_check_branch
    %17 = sbr.rel (0) target = $region17
  $region16: #{tpu_custom_call.1} parent=0 // pred_region
    _
  $region17: #{tpu_custom_call.1} parent=0 // pred_fallthru
    _
  // Predicated region
  $region18: #{tpu_custom_call.1} parent=0 // pred_check
    _
  $region19: #{tpu_custom_call.1} parent=0 // pred_check_branch
    %19 = sbr.rel (0) target = $region21
  $region20: #{tpu_custom_call.1} parent=0 // pred_region
    _
  $region21: #{tpu_custom_call.1} parent=0 // pred_fallthru
    _
  %v20 = vld [vmem:[%s0] sm:$0xff]
  %v21 = vld [vmem:[%s1] sm:$0xf]
  %v22 = vld [vmem:[%s2] sm:$0x1]
  %v24 = vlaneseq
  %v25 = vshrl.u32 %v24, 7
  %v26 = vsub.s32 0, %v25
  %v27 = vrot.slane %v22, %v26
  %vm29 = vcmask 31744
  %v31 = vsel %vm29, %v20, 0
  %vm33 = vcmask 1043456
  %v35 = vsel %vm33, %v21, 0
  %37 = vmatprep.subr.mxu0 0.0
  %38 = vmatpush1.msra.mxu0 %v35
  %39 = vmatprep.subr.mxu0 0.0
  %40 = vmatpush1.msra.mxu0 0.0
  %41 = vmatprep.subr.mxu0 0.0
  %42 = vmatpush1.msra.mxu0 0.0
  %43 = vmatprep.subr.mxu0 0.0
  %44 = vmatpush1.msra.mxu0 0.0
  %45 = vmatprep.subr.mxu0 0.0
  %46 = vmatpush1.msra.mxu0 0.0
  %47 = vmatprep.subr.mxu0 0.0
  %48 = vmatpush1.msra.mxu0 0.0
  %49 = vmatprep.subr.mxu0 0.0
  %50 = vmatpush1.msra.mxu0 0.0
  %51 = vmatprep.subr.mxu0 0.0
  %52 = vmatpush1.msra.mxu0 0.0
  %53 = vmatprep.subr.mxu0 0.0
  %54 = vmatpush1.msra.mxu0 0.0
  %55 = vmatprep.subr.mxu0 0.0
  %56 = vmatpush1.msra.mxu0 0.0
  %57 = vmatprep.subr.mxu0 0.0
  %58 = vmatpush1.msra.mxu0 0.0
  %59 = vmatprep.subr.mxu0 0.0
  %60 = vmatpush1.msra.mxu0 0.0
  %61 = vmatprep.subr.mxu0 0.0
  %62 = vmatpush1.msra.mxu0 0.0
  %63 = vmatprep.subr.mxu0 0.0
  %64 = vmatpush1.msra.mxu0 0.0
  %65 = vmatprep.subr.mxu0 0.0
  %66 = vmatpush1.msra.mxu0 0.0
  %67 = vmatprep.subr.mxu0 0.0
  %68 = vmatpush1.msra.mxu0 0.0
  %69 = vmatprep.subr.mxu0 0.0
  %70 = vmatpush1.msra.mxu0 0.0
  %71 = vmatprep.subr.mxu0 0.0
  %72 = vmatpush1.msra.mxu0 0.0
  %73 = vmatprep.subr.mxu0 0.0
  %74 = vmatpush1.msra.mxu0 0.0
  %75 = vmatprep.subr.mxu0 0.0
  %76 = vmatpush1.msra.mxu0 0.0
  %77 = vmatprep.subr.mxu0 0.0
  %78 = vmatpush1.msra.mxu0 0.0
  %79 = vmatprep.subr.mxu0 0.0
  %80 = vmatpush1.msra.mxu0 0.0
  %81 = vmatprep.subr.mxu0 0.0
  %82 = vmatpush1.msra.mxu0 0.0
  %83 = vmatprep.subr.mxu0 0.0
  %84 = vmatpush1.msra.mxu0 0.0
  %85 = vmatprep.subr.mxu0 0.0
  %86 = vmatpush1.msra.mxu0 0.0
  %87 = vmatprep.subr.mxu0 0.0
  %88 = vmatpush1.msra.mxu0 0.0
  %89 = vmatprep.subr.mxu0 0.0
  %90 = vmatpush1.msra.mxu0 0.0
  %91 = vmatprep.subr.mxu0 0.0
  %92 = vmatpush1.msra.mxu0 0.0
  %93 = vmatprep.subr.mxu0 0.0
  %94 = vmatpush1.msra.mxu0 0.0
  %95 = vmatprep.subr.mxu0 0.0
  %96 = vmatpush1.msra.mxu0 0.0
  %97 = vmatprep.subr.mxu0 0.0
  %98 = vmatpush1.msra.mxu0 0.0
  %99 = vmatprep.subr.mxu0 0.0
  %100 = vmatpush1.msra.mxu0 0.0
  %101 = vmatprep.mubr.f32.mxu0 0.0
  %102 = vmatmul.mubr.f32.gmra.mrb[0].mxu0 %v31
  %v103 = vpop.f32.mrb[0].mxu0
  %v104 = vadd.f32 %v27, %v103
  %v105 = vpop.f32.mrb[0].mxu0
  %106 = vdwg.mxu0
  %v107 = vmax.f32 %v104, 0.0
  %v108 = vld [vmem:[%s3] sm:$0xff]
  %v109 = vld [vmem:[%s3 + $0x8] sm:$0xff]
  %v110 = vld [vmem:[%s3 + $0x10] sm:$0xff]
  %v111 = vld [vmem:[%s3 + $0x18] sm:$0xff]
  %v112 = vld [vmem:[%s4] sm:$0x1]
  %v114 = vlaneseq
  %v115 = vshrl.u32 %v114, 7
  %v116 = vsub.s32 0, %v115
  %v117 = vrot.slane %v112, %v116
  %vm119 = vcmask 261120
  %v121 = vsel %vm119, %v107, 0
  %123 = vmatprep.subr.mxu0 0.0
  %124 = vmatpush1.msra.mxu0 %v108
  %125 = vmatprep.subr.mxu0 0.0
  %126 = vmatpush1.msra.mxu0 %v109
  %127 = vmatprep.subr.mxu0 0.0
  %128 = vmatpush1.msra.mxu0 %v110
  %129 = vmatprep.subr.mxu0 0.0
  %130 = vmatpush1.msra.mxu0 %v111
  %131 = vmatprep.subr.mxu0 0.0
  %132 = vmatpush1.msra.mxu0 0.0
  %133 = vmatprep.subr.mxu0 0.0
  %134 = vmatpush1.msra.mxu0 0.0
  %135 = vmatprep.subr.mxu0 0.0
  %136 = vmatpush1.msra.mxu0 0.0
  %137 = vmatprep.subr.mxu0 0.0
  %138 = vmatpush1.msra.mxu0 0.0
  %139 = vmatprep.subr.mxu0 0.0
  %140 = vmatpush1.msra.mxu0 0.0
  %141 = vmatprep.subr.mxu0 0.0
  %142 = vmatpush1.msra.mxu0 0.0
  %143 = vmatprep.subr.mxu0 0.0
  %144 = vmatpush1.msra.mxu0 0.0
  %145 = vmatprep.subr.mxu0 0.0
  %146 = vmatpush1.msra.mxu0 0.0
  %147 = vmatprep.subr.mxu0 0.0
  %148 = vmatpush1.msra.mxu0 0.0
  %149 = vmatprep.subr.mxu0 0.0
  %150 = vmatpush1.msra.mxu0 0.0
  %151 = vmatprep.subr.mxu0 0.0
  %152 = vmatpush1.msra.mxu0 0.0
  %153 = vmatprep.subr.mxu0 0.0
  %154 = vmatpush1.msra.mxu0 0.0
  %155 = vmatprep.subr.mxu0 0.0
  %156 = vmatpush1.msra.mxu0 0.0
  %157 = vmatprep.subr.mxu0 0.0
  %158 = vmatpush1.msra.mxu0 0.0
  %159 = vmatprep.subr.mxu0 0.0
  %160 = vmatpush1.msra.mxu0 0.0
  %161 = vmatprep.subr.mxu0 0.0
  %162 = vmatpush1.msra.mxu0 0.0
  %163 = vmatprep.subr.mxu0 0.0
  %164 = vmatpush1.msra.mxu0 0.0
  %165 = vmatprep.subr.mxu0 0.0
  %166 = vmatpush1.msra.mxu0 0.0
  %167 = vmatprep.subr.mxu0 0.0
  %168 = vmatpush1.msra.mxu0 0.0
  %169 = vmatprep.subr.mxu0 0.0
  %170 = vmatpush1.msra.mxu0 0.0
  %171 = vmatprep.subr.mxu0 0.0
  %172 = vmatpush1.msra.mxu0 0.0
  %173 = vmatprep.subr.mxu0 0.0
  %174 = vmatpush1.msra.mxu0 0.0
  %175 = vmatprep.subr.mxu0 0.0
  %176 = vmatpush1.msra.mxu0 0.0
  %177 = vmatprep.subr.mxu0 0.0
  %178 = vmatpush1.msra.mxu0 0.0
  %179 = vmatprep.subr.mxu0 0.0
  %180 = vmatpush1.msra.mxu0 0.0
  %181 = vmatprep.subr.mxu0 0.0
  %182 = vmatpush1.msra.mxu0 0.0
  %183 = vmatprep.subr.mxu0 0.0
  %184 = vmatpush1.msra.mxu0 0.0
  %185 = vmatprep.subr.mxu0 0.0
  %186 = vmatpush1.msra.mxu0 0.0
  %187 = vmatprep.mubr.f32.mxu0 0.0
  %188 = vmatmul.mubr.f32.gmra.mrb[0].mxu0 %v121
  %v189 = vpop.f32.mrb[0].mxu0
  %v190 = vadd.f32 %v117, %v189
  %v191 = vpop.f32.mrb[0].mxu0
  %192 = vdwg.mxu0
  %vm193 = vcmask 15360
  %v194 = vsel %vm193, %v190, -inf
  %195 = vmax.xlane.f32.xlu0 %v194
  %v196 = vpop.xlane.xlu0 %195
  %v197 = vsub.f32 %v190, %v196
  %v198 = vmul.f32 %v197, 1.442695
  %v199 = vpow.pop %v198
  %v200 = vsel %vm193, %v199, 0.0
  %201 = vadd.xlane.f32.xlu0 %v200
  %v202 = vpop.xlane.xlu0 %201
  %v203 = vrcp.pop %v202
  %v204 = vmul.f32 %v202, %v203
  %v205 = vsub.f32 2.0, %v204
  %v206 = vmul.f32 %v203, %v205
  %v207 = vmul.f32 %v199, %v206
  %208 = vst.msk [vmem:[%s5] sm:$0xff] %vm193, %v207
  // Predicated region
  $region22: #{tpu_custom_call.1} parent=0 // pred_check
    _
  $region23: #{tpu_custom_call.1} parent=0 // pred_check_branch
    %210 = sbr.rel (0) target = $region25
  $region24: #{tpu_custom_call.1} parent=0 // pred_region
    _
  $region25: #{tpu_custom_call.1} parent=0 // pred_fallthru
    _
  // Predicated region
  $region26: #{tpu_custom_call.1} parent=0 // pred_check
    _
  $region27: #{tpu_custom_call.1} parent=0 // pred_check_branch
    %212 = sbr.rel (0) target = $region29
  $region28: #{tpu_custom_call.1} parent=0 // pred_region
    _
  $region29: #{tpu_custom_call.1} parent=0 // pred_fallthru
    _

</llo_original>
